<compile_context>
chip_gen: v6e
topology: v6e:2x2x1
jax: 0.10.0
libtpu: 0.0.40
codegen_flags: <defaults>
</compile_context>

<pallas_src>
import functools

import jax
import jax.numpy as jnp
from jax.experimental import pallas as pl
from jax.experimental.pallas import tpu as pltpu


_NEG_FILL = -10000000.0  # torch masked_fill_ value; do NOT "improve" to -inf


# ---------------------------------------------------------------------------
# Kernel 1: resident-kv layout (moderate S -- whole sequence in VMEM per batch)
# ---------------------------------------------------------------------------
def _ori_attention_resident_kernel(kv_ref, kt_ref, mq_ref, mk_ref, o_ref, *,
                                   scale, q_tile):
    # kv_ref: (1, S,  Dp) bf16  values; query rows are sliced out of this slab
    # kt_ref: (1, Dp, S ) bf16  keys, pre-transposed (transpose hoisted out)
    # mq_ref: (1, TJ, 1)        validity of this tile's query rows
    # mk_ref: (1, 1,  S)        validity of the key columns (lane layout)
    # o_ref : (1, TJ, Dp)
    j = pl.program_id(1)
    row0 = pl.multiple_of(j * q_tile, q_tile)

    # Query rows come straight out of the resident slab: no extra q DMA stream.
    q = kv_ref[0, pl.ds(row0, q_tile), :]                 # (TJ, Dp) bf16
    qs = q * jnp.asarray(scale, q.dtype)                  # fold 1/D**0.25 into q

    kt = kt_ref[0]                                        # (Dp, S) bf16
    # scores[j, i] = (scale * x_j) . x_i  -- canonical MXU matmul, f32 acc.
    scores = jax.lax.dot_general(
        qs, kt, (((1,), (0,)), ((), ())),
        preferred_element_type=jnp.float32)               # (TJ, S) f32

    # Mask: (m_j != 0) & (m_i != 0) -- pure VPU broadcast compare.
    valid_q = mq_ref[0] != 0.0                            # (TJ, 1) bool
    valid_k = mk_ref[0] != 0.0                            # (1,  S) bool
    scores = jnp.where(valid_q & valid_k, scores, jnp.float32(_NEG_FILL))

    # Row softmax along the lane axis.  Normalization is deferred past the PV
    # matmul: only the (TJ, Dp) result gets scaled, not the (TJ, S) tile.
    mmax = jnp.max(scores, axis=-1, keepdims=True)        # (TJ, 1)
    e = jnp.exp(scores - mmax)                            # (TJ, S) f32
    denom = jnp.sum(e, axis=-1, keepdims=True)            # (TJ, 1)

    v = kv_ref[0]                                         # (S, Dp) bf16
    out_un = jax.lax.dot_general(
        e.astype(v.dtype), v, (((1,), (0,)), ((), ())),
        preferred_element_type=jnp.float32)               # (TJ, Dp) f32

    out = out_un * pl.reciprocal(denom, approx=True)      # EUP reciprocal
    o_ref[0] = out.astype(o_ref.dtype)


# ---------------------------------------------------------------------------
# Kernel 2: flash-style K tiling (long S -- VMEM independent of S)
# ---------------------------------------------------------------------------
def _ori_attention_flash_kernel(q_ref, kt_ref, v_ref, mq_ref, mk_ref, o_ref,
                                m_sc, l_sc, acc_sc, *, scale):
    # q_ref : (1, TJ, Dp)   kt_ref: (1, Dp, TK)   v_ref: (1, TK, Dp)
    # mq_ref: (1, TJ, 1)    mk_ref: (1, 1,  TK)   o_ref: (1, TJ, Dp)
    # scratch: m_sc / l_sc (TJ, 1) f32, acc_sc (TJ, Dp) f32
    k = pl.program_id(2)

    @pl.when(k == 0)
    def _():
        m_sc[...] = jnp.full_like(m_sc, -jnp.inf)
        l_sc[...] = jnp.zeros_like(l_sc)
        acc_sc[...] = jnp.zeros_like(acc_sc)

    q = q_ref[0]                                          # (TJ, Dp) bf16
    qs = q * jnp.asarray(scale, q.dtype)
    s = jax.lax.dot_general(
        qs, kt_ref[0], (((1,), (0,)), ((), ())),
        preferred_element_type=jnp.float32)               # (TJ, TK) f32

    valid = (mq_ref[0] != 0.0) & (mk_ref[0] != 0.0)       # (TJ, TK) bool
    s = jnp.where(valid, s, jnp.float32(_NEG_FILL))

    m_prev = m_sc[...]
    m_new = jnp.maximum(m_prev, jnp.max(s, axis=-1, keepdims=True))
    alpha = jnp.exp(m_prev - m_new)                       # (TJ, 1)
    p = jnp.exp(s - m_new)                                # (TJ, TK)
    l_sc[...] = alpha * l_sc[...] + jnp.sum(p, axis=-1, keepdims=True)
    v = v_ref[0]                                          # (TK, Dp) bf16
    acc_sc[...] = alpha * acc_sc[...] + jax.lax.dot_general(
        p.astype(v.dtype), v, (((1,), (0,)), ((), ())),
        preferred_element_type=jnp.float32)
    m_sc[...] = m_new

    @pl.when(k == pl.num_programs(2) - 1)
    def _():
        o_ref[0] = (acc_sc[...] * pl.reciprocal(l_sc[...], approx=True)
                    ).astype(o_ref.dtype)


# ---------------------------------------------------------------------------
# Wrapper
# ---------------------------------------------------------------------------
def _choose_q_tile(S, target):
    """Largest multiple-of-8 divisor of S not exceeding `target` (else S)."""
    if S <= target:
        return S
    t = target - (target % 8)
    while t >= 8:
        if S % t == 0:
            return t
        t -= 8
    return S


def _choose_k_tile(S, target):
    """Largest multiple-of-128 divisor of S not exceeding `target` (else S)."""
    if S <= target or S % 128 != 0:
        return S
    t = target - (target % 128)
    while t >= 128:
        if S % t == 0:
            return t
        t -= 128
    return S


def _vmem_capacity_bytes():
    try:
        cap = int(getattr(pltpu.get_tpu_info(), "vmem_capacity_bytes", 0))
        if cap > 0:
            return cap
    except Exception:
        pass
    return 64 << 20  # conservative: v7x per-TensorCore VMEM


def _default_q_tile_target():
    # v5e: 128x128 MXUs, no bf16 VPU/EUP, 1 vst slot -> smaller score tiles.
    try:
        kind = jax.devices()[0].device_kind.lower()
    except Exception:
        kind = ""
    return 128 if ("v5" in kind or "v4" in kind) else 256


def ori_attention(x, mask, *, q_tile_target=None, k_tile_target=512,
                  use_flash=None):
    """OriAttention forward.  x: (B,S,D) float, mask: (B,S,1) float 0/1."""
    B, S, D = x.shape
    scale = 1.0 / (float(D) ** 0.25)          # k.size(-1)**0.25 with head=1
    out_dtype = x.dtype
    if q_tile_target is None:
        q_tile_target = _default_q_tile_target()

    # Lane-dense feature dim: zero-pad D up to a multiple of 128 so q/k/v/out
    # blocks fill full vregs and the output store is an unmasked vst.  Zero
    # columns contribute nothing to either matmul, so results are unchanged.
    Dp = D if D % 128 == 0 else ((D // 128) + 1) * 128
    mm_dtype = jnp.bfloat16                   # MXU-native; accumulation in f32
    xp = x if Dp == D else jnp.pad(x, ((0, 0), (0, 0), (0, Dp - D)))
    kv = xp.astype(mm_dtype)                  # (B, S, Dp) values / query rows
    kt = jnp.swapaxes(kv, 1, 2)               # (B, Dp, S) keys, pre-transposed
    mask_kt = mask.reshape(B, 1, S)           # key-column mask on the lane axis

    cap = _vmem_capacity_bytes()
    TJ = _choose_q_tile(S, q_tile_target)

    # Resident footprint (per core): both bf16 slabs double-buffered + output
    # blocks + the live f32 score/exp temporaries.
    out_isz = jnp.dtype(out_dtype).itemsize
    resident = (2 * 2 * (S * Dp * 2)
                + 2 * TJ * Dp * out_isz
                + 3 * TJ * S * 4 + 2 * TJ * Dp * 4)
    if use_flash is None:
        use_flash = resident > int(0.7 * cap)

    if not use_flash:
        vmem_limit = int(min(max(resident + (4 << 20), 24 << 20),
                             int(0.9 * cap)))
        kernel = functools.partial(_ori_attention_resident_kernel,
                                   scale=scale, q_tile=TJ)
        out_p = pl.pallas_call(
            kernel,
            out_shape=jax.ShapeDtypeStruct((B, S, Dp), out_dtype),
            grid=(B, S // TJ),
            in_specs=[
                # kv/kt index maps are constant in j: slabs are revisited
                # across all j steps of a batch (DMA'd once per batch).
                # TODO(synk): on v7x, pipeline_mode=pl.Buffered(1) on these two
                # specs would halve slab VMEM at the cost of one exposed DMA
                # per batch.
                pl.BlockSpec((1, S, Dp), lambda b, j: (b, 0, 0)),
                pl.BlockSpec((1, Dp, S), lambda b, j: (b, 0, 0)),
                pl.BlockSpec((1, TJ, 1), lambda b, j: (b, j, 0)),
                pl.BlockSpec((1, 1, S), lambda b, j: (b, 0, 0)),
            ],
            out_specs=pl.BlockSpec((1, TJ, Dp), lambda b, j: (b, j, 0)),
            compiler_params=pltpu.CompilerParams(
                dimension_semantics=("parallel", "parallel"),
                vmem_limit_bytes=vmem_limit),
        )(kv, kt, mask, mask_kt)
    else:
        TK = _choose_k_tile(S, k_tile_target)
        flash = (2 * 2 * (TJ * Dp + Dp * TK + TK * Dp)    # bf16 blocks, 2-buf
                 + 2 * TJ * Dp * out_isz
                 + (TJ * Dp + 2 * TJ) * 4                 # scratch
                 + 3 * TJ * TK * 4)                       # f32 temporaries
        vmem_limit = int(min(max(flash + (4 << 20), 24 << 20), int(0.9 * cap)))
        kernel = functools.partial(_ori_attention_flash_kernel, scale=scale)
        out_p = pl.pallas_call(
            kernel,
            out_shape=jax.ShapeDtypeStruct((B, S, Dp), out_dtype),
            grid=(B, S // TJ, S // TK),
            in_specs=[
                pl.BlockSpec((1, TJ, Dp), lambda b, j, k: (b, j, 0)),  # q rows
                pl.BlockSpec((1, Dp, TK), lambda b, j, k: (b, 0, k)),  # keys^T
                pl.BlockSpec((1, TK, Dp), lambda b, j, k: (b, k, 0)),  # values
                pl.BlockSpec((1, TJ, 1), lambda b, j, k: (b, j, 0)),   # q mask
                pl.BlockSpec((1, 1, TK), lambda b, j, k: (b, 0, k)),   # k mask
            ],
            out_specs=pl.BlockSpec((1, TJ, Dp), lambda b, j, k: (b, j, 0)),
            scratch_shapes=[pltpu.VMEM((TJ, 1), jnp.float32),
                            pltpu.VMEM((TJ, 1), jnp.float32),
                            pltpu.VMEM((TJ, Dp), jnp.float32)],
            compiler_params=pltpu.CompilerParams(
                dimension_semantics=("parallel", "parallel", "arbitrary"),
                vmem_limit_bytes=vmem_limit),
        )(kv, kt, kv, mask, mask_kt)

    return out_p if Dp == D else out_p[..., :D]


def ori_attention_ref(x, mask):
    """Pure-JAX reference matching the PyTorch forward exactly (head=1)."""
    D = x.shape[-1]
    scores = jnp.einsum("bid,bjd->bij", x, x) / (float(D) ** 0.25)
    mm = jnp.einsum("bik,bjk->bij", mask, mask) != 0.0
    scores = jnp.where(mm, scores, _NEG_FILL)
    p = jax.nn.softmax(scores, axis=1)   # normalize over i (torch dim=2)
    return jnp.einsum("bij,bid->bjd", p, x)


if __name__ == "__main__":
    key = jax.random.PRNGKey(0)
    k1, k2, k3 = jax.random.split(key, 3)

    # --- small case: resident-kv path --------------------------------------
    B, S, D = 2, 8, 32
    x = jax.random.normal(k1, (B, S, D), dtype=jnp.float32)
    mask = jnp.ones((B, S, 1), dtype=jnp.float32)
    mask = mask.at[1, S - 2:, 0].set(0.0)          # two padding tokens in b=1

    out = jax.block_until_ready(ori_attention(x, mask))
    ref = ori_attention_ref(x, mask)
    assert out.shape == (B, S, D)
    # bf16 matmul operands + EUP approx reciprocal -> relaxed tolerance
    assert jnp.allclose(out, ref, atol=5e-2, rtol=5e-2), (
        f"resident path max abs err {jnp.max(jnp.abs(out - ref))}")

    # --- longer case: flash (K-tiled) path exercised explicitly ------------
    B2, S2, D2 = 1, 256, 32
    x2 = jax.random.normal(k2, (B2, S2, D2), dtype=jnp.float32)
    mask2 = (jax.random.uniform(k3, (B2, S2, 1)) > 0.2).astype(jnp.float32)
    mask2 = mask2.at[0, S2 - 16:, 0].set(0.0)
    ref2 = ori_attention_ref(x2, mask2)

    out2 = jax.block_until_ready(
        ori_attention(x2, mask2, q_tile_target=128, k_tile_target=128,
                      use_flash=True))
    assert out2.shape == (B2, S2, D2)
    assert jnp.allclose(out2, ref2, atol=5e-2, rtol=5e-2), (
        f"flash path max abs err {jnp.max(jnp.abs(out2 - ref2))}")

    # Same input through the resident path for cross-validation.
    out2r = jax.block_until_ready(ori_attention(x2, mask2, use_flash=False))
    assert jnp.allclose(out2r, ref2, atol=5e-2, rtol=5e-2), (
        f"resident path (S=256) max abs err {jnp.max(jnp.abs(out2r - ref2))}")

    print("KERNEL_OK")
</pallas_src>

<mosaic_0001>
module attributes {stable_mosaic.version = 11 : i64} {
  func.func @_ori_attention_resident_kernel(%arg0: i32, %arg1: i32, %arg2: memref<1x8x128xbf16, #tpu.memory_space<vmem>>, %arg3: memref<1x128x8xbf16, #tpu.memory_space<vmem>>, %arg4: memref<1x8x1xf32, #tpu.memory_space<vmem>>, %arg5: memref<1x1x8xf32, #tpu.memory_space<vmem>>, %arg6: memref<1x8x128xf32, #tpu.memory_space<vmem>>) attributes {dimension_semantics = [#tpu.dimension_semantics<parallel>, #tpu.dimension_semantics<parallel>], iteration_bounds = array<i64: 2, 1>, scalar_prefetch = 0 : i64, scratch_operands = 0 : i64, tpu.core_type = #tpu.core_type<tc>, window_params = [{transform_indices = @transform_0, window_bounds = array<i64: 1, 8, 128>}, {transform_indices = @transform_1, window_bounds = array<i64: 1, 128, 8>}, {transform_indices = @transform_2, window_bounds = array<i64: 1, 8, 1>}, {transform_indices = @transform_3, window_bounds = array<i64: 1, 1, 8>}, {transform_indices = @transform_4, window_bounds = array<i64: 1, 8, 128>}]} {
    %c8_i32 = arith.constant 8 : i32
    %0 = arith.muli %arg1, %c8_i32 : i32
    %1 = tpu.assume_multiple %0, 8 : i32
    %c0 = arith.constant 0 : index
    %2 = arith.index_cast %1 : i32 to index
    %c0_0 = arith.constant 0 : index
    %3 = vector.load %arg2[%c0, %2, %c0_0] : memref<1x8x128xbf16, #tpu.memory_space<vmem>>, vector<1x8x128xbf16>
    %4 = vector.shape_cast %3 : vector<1x8x128xbf16> to vector<8x128xbf16>
    %cst = arith.constant 4.199220e-01 : bf16
    %5 = vector.broadcast %cst : bf16 to vector<8x128xbf16>
    %6 = arith.mulf %4, %5 : vector<8x128xbf16>
    %c0_1 = arith.constant 0 : index
    %c0_2 = arith.constant 0 : index
    %c0_3 = arith.constant 0 : index
    %7 = vector.load %arg3[%c0_1, %c0_2, %c0_3] : memref<1x128x8xbf16, #tpu.memory_space<vmem>>, vector<1x128x8xbf16>
    %8 = vector.shape_cast %7 : vector<1x128x8xbf16> to vector<128x8xbf16>
    %cst_4 = arith.constant dense<0.000000e+00> : vector<8x8xf32>
    %9 = tpu.matmul %6, %8, %cst_4 {dimension_numbers = #tpu.dot_dimension_numbers<[1], [0], [0], [1], [0, 0, 1, 1], [], []>} : vector<8x128xbf16>, vector<128x8xbf16>, vector<8x8xf32> -> vector<8x8xf32>
    %c0_5 = arith.constant 0 : index
    %c0_6 = arith.constant 0 : index
    %c0_7 = arith.constant 0 : index
    %10 = vector.load %arg4[%c0_5, %c0_6, %c0_7] : memref<1x8x1xf32, #tpu.memory_space<vmem>>, vector<1x8x1xf32>
    %11 = vector.shape_cast %10 : vector<1x8x1xf32> to vector<8x1xf32>
    %cst_8 = arith.constant 0.000000e+00 : f32
    %12 = vector.broadcast %cst_8 : f32 to vector<8x1xf32>
    %13 = arith.cmpf one, %11, %12 : vector<8x1xf32>
    %c0_9 = arith.constant 0 : index
    %c0_10 = arith.constant 0 : index
    %c0_11 = arith.constant 0 : index
    %14 = vector.load %arg5[%c0_9, %c0_10, %c0_11] : memref<1x1x8xf32, #tpu.memory_space<vmem>>, vector<1x1x8xf32>
    %15 = vector.shape_cast %14 : vector<1x1x8xf32> to vector<1x8xf32>
    %cst_12 = arith.constant 0.000000e+00 : f32
    %16 = vector.broadcast %cst_12 : f32 to vector<1x8xf32>
    %17 = arith.cmpf one, %15, %16 : vector<1x8xf32>
    %18 = vector.broadcast %13 : vector<8x1xi1> to vector<8x8xi1>
    %19 = vector.broadcast %17 : vector<1x8xi1> to vector<8x8xi1>
    %20 = arith.andi %18, %19 : vector<8x8xi1>
    %cst_13 = arith.constant -1.000000e+07 : f32
    %21 = vector.broadcast %cst_13 : f32 to vector<8x8xf32>
    %22 = arith.select %20, %9, %21 : vector<8x8xi1>, vector<8x8xf32>
    %cst_14 = arith.constant dense<0xFF800000> : vector<8xf32>
    %23 = vector.multi_reduction <maximumf>, %22, %cst_14 [1] : vector<8x8xf32> to vector<8xf32>
    %24 = vector.shape_cast %23 : vector<8xf32> to vector<8x1xf32>
    %25 = vector.broadcast %24 : vector<8x1xf32> to vector<8x8xf32>
    %26 = arith.subf %22, %25 : vector<8x8xf32>
    %27 = math.exp %26 : vector<8x8xf32>
    %cst_15 = arith.constant dense<0.000000e+00> : vector<8xf32>
    %28 = vector.multi_reduction <add>, %27, %cst_15 [1] : vector<8x8xf32> to vector<8xf32>
    %29 = vector.shape_cast %28 : vector<8xf32> to vector<8x1xf32>
    %c0_16 = arith.constant 0 : index
    %c0_17 = arith.constant 0 : index
    %c0_18 = arith.constant 0 : index
    %30 = vector.load %arg2[%c0_16, %c0_17, %c0_18] : memref<1x8x128xbf16, #tpu.memory_space<vmem>>, vector<1x8x128xbf16>
    %31 = vector.shape_cast %30 : vector<1x8x128xbf16> to vector<8x128xbf16>
    %32 = arith.truncf %27 : vector<8x8xf32> to vector<8x8xbf16>
    %cst_19 = arith.constant dense<0.000000e+00> : vector<8x128xf32>
    %33 = tpu.matmul %32, %31, %cst_19 {dimension_numbers = #tpu.dot_dimension_numbers<[1], [0], [0], [1], [0, 0, 1, 1], [], []>} : vector<8x8xbf16>, vector<8x128xbf16>, vector<8x128xf32> -> vector<8x128xf32>
    %34 = tpu.reciprocal %29 {approx = true} : vector<8x1xf32> -> vector<8x1xf32>
    %35 = vector.broadcast %34 : vector<8x1xf32> to vector<8x128xf32>
    %36 = arith.mulf %33, %35 : vector<8x128xf32>
    %c0_20 = arith.constant 0 : index
    %c0_21 = arith.constant 0 : index
    %c0_22 = arith.constant 0 : index
    %37 = vector.load %arg6[%c0_20, %c0_21, %c0_22] : memref<1x8x128xf32, #tpu.memory_space<vmem>>, vector<1x8x128xf32>
    %38 = vector.shape_cast %37 : vector<1x8x128xf32> to vector<8x128xf32>
    %39 = vector.shape_cast %36 : vector<8x128xf32> to vector<1x8x128xf32>
    tpu.vector_store %arg6[%c0_20, %c0_21, %c0_22], %39 {strides = array<i32>} : memref<1x8x128xf32, #tpu.memory_space<vmem>>, vector<1x8x128xf32>,
    return
  }
  func.func @transform_0(%arg0: i32, %arg1: i32) -> (i32, i32, i32) {
    %c0_i32 = arith.constant 0 : i32
    %c0_i32_0 = arith.constant 0 : i32
    %c0_i32_1 = arith.constant 0 : i32
    return %arg0, %c0_i32, %c0_i32_0 : i32, i32, i32
  }
  func.func @transform_1(%arg0: i32, %arg1: i32) -> (i32, i32, i32) {
    %c0_i32 = arith.constant 0 : i32
    %c0_i32_0 = arith.constant 0 : i32
    %c0_i32_1 = arith.constant 0 : i32
    return %arg0, %c0_i32, %c0_i32_0 : i32, i32, i32
  }
  func.func @transform_2(%arg0: i32, %arg1: i32) -> (i32, i32, i32) {
    %c0_i32 = arith.constant 0 : i32
    %c0_i32_0 = arith.constant 0 : i32
    return %arg0, %arg1, %c0_i32 : i32, i32, i32
  }
  func.func @transform_3(%arg0: i32, %arg1: i32) -> (i32, i32, i32) {
    %c0_i32 = arith.constant 0 : i32
    %c0_i32_0 = arith.constant 0 : i32
    %c0_i32_1 = arith.constant 0 : i32
    return %arg0, %c0_i32, %c0_i32_0 : i32, i32, i32
  }
  func.func @transform_4(%arg0: i32, %arg1: i32) -> (i32, i32, i32) {
    %c0_i32 = arith.constant 0 : i32
    %c0_i32_0 = arith.constant 0 : i32
    return %arg0, %arg1, %c0_i32 : i32, i32, i32
  }
}

</mosaic_0001>

<llo_original>
// kernel: tpu_custom_call.1
$region0: #{tpu_custom_call.1}
  #allocation0 [shape = 'u32[]', space=smem, size = 0x4, offset = 0x4, fixed_abs, tag = 'smem constant byte address 0x4 - core index']
  #allocation1 [shape = 'u32[144,128]{1,0:T(1,128)}', space=vmem, size = 0x12000, scoped, tag = 'internal scratch']
  %s0 = inlined_call_operand.vmem [shape: bf16[2,8,128], index: 0, kind: input, shape index: {}]
  %s1 = inlined_call_operand.vmem [shape: bf16[2,128,8], index: 1, kind: input, shape index: {}]
  %s2 = inlined_call_operand.vmem [shape: f32[2,8,1], index: 2, kind: input, shape index: {}]
  %s3 = inlined_call_operand.vmem [shape: f32[2,1,8], index: 3, kind: input, shape index: {}]
  %s4 = inlined_call_operand.hbm [shape: f32[2,8,128], index: 4, kind: output, shape index: {}]
  %s5 = sld [smem:[#allocation0]]
  $region49: #{tpu_custom_call.1} parent=0
    _
  %s7 = ssub.s32 1, %s5
  %s8 = scalar_select 0, %s7, %s5
  $region1: #{tpu_custom_call.1} parent=0
    #allocation2 [shape = 'u8[8192]{0}', space=vmem, size = 0x2000, scoped, tag = 'output window, operand 0']
    #allocation3 [shape = 's32[2]{0}', space=sflag, size = 0x8, scoped, tag = 'scoped memory for tpu_custom_call.1']
    %9 = vsyncpa [#allocation3], 0
    %s10 = scalar_lea.sflag [#allocation3], 1
    %11 = vsyncpa %s10, 0
    loop: start=0, step=1, limit=4
    $region2: #{tpu_custom_call.1} parent=1 // loop_pre_header
      _
    $region3: #{tpu_custom_call.1} parent=1 // loop_header
      %s13 = sphi 0, %s17
      %p14 = scmp.ge.s32.totalorder %s13, 4
      %s20 = sphi 0, %s32
      %s21 = sphi 0, %s28
      %s22 = sphi 0, %s20
      %s23 = sphi 0, %s21
      %s24 = sphi 0, %s22
      %s25 = sphi 0, %s23
      %s35 = sphi 0, %s37
      %s38 = sphi 0, %s35
      %s39 = sphi 0, %s38
      %s55 = sphi 0, %s39
      %s61 = sphi 0, %s63
      %s64 = sphi 0, %s61
      %s65 = sphi 0, %s64
      %s81 = sphi 0, %s65
      %s89 = sphi 0, %s91
      %s92 = sphi 0, %s89
      %s93 = sphi 0, %s92
      %s109 = sphi 0, %s93
      %s115 = sphi 0, %s117
      %s118 = sphi 0, %s115
      %s119 = sphi 0, %s118
      %s135 = sphi 0, %s119
      %s143 = sphi 0, %s145
      %s146 = sphi 0, %s143
      %s147 = sphi 0, %s146
      %s163 = sphi 0, %s147
    $region4: #{tpu_custom_call.1} parent=1 // loop_header_branch
      %16 = sbr.rel (%p14) target = $region8
    $region5: #{tpu_custom_call.1} parent=1 // loop_body
      %s18 = ssub.s32 %s13, 1
      %s19 = ssub.s32 %s13, 2
      %s26 = sadd.s32 1, %s21
      %p27 = scmp.ge.s32.totalorder %s26, 1
      %s28 = scalar_select %p27, 0, %s26
      %s29 = sadd.s32 1, %s20
      %s30 = scalar_select %p27, %s29, %s20
      %p31 = scmp.ge.s32.totalorder %s30, 2
      %s32 = scalar_select %p31, 0, %s30
      %s33 = ssub.s32 %s20, %s32
      %p34 = scmp.eq.s32.totalorder %s33, 0
      %s36 = sadd.s32 %s35, 1
      %s37 = scalar_select %p34, %s35, %s36
      %p40 = pneg %p34
      %p41 = scmp.eq.s32.totalorder %s13, 1
      %p42 = por %p40, %p41
      %p43 = scmp.ne.s32.totalorder %s35, %s38
      %p44 = scmp.eq.s32.totalorder %s13, 0
      %p45 = por %p43, %p44
      %p46 = scmp.ne.s32.totalorder %s35, %s38
      %p47 = scmp.eq.s32.totalorder %s18, 1
      %p48 = por %p46, %p47
      %p49 = scmp.ne.s32.totalorder %s38, %s39
      %p50 = scmp.eq.s32.totalorder %s18, 0
      %p51 = por %p49, %p50
      %p52 = scmp.ne.s32.totalorder %s38, %s39
      %p53 = scmp.eq.s32.totalorder %s19, 1
      %p54 = por %p52, %p53
      %p56 = scmp.ne.s32.totalorder %s39, %s55
      %p57 = scmp.eq.s32.totalorder %s19, 0
      %p58 = por %p56, %p57
      %s59 = ssub.s32 %s20, %s32
      %p60 = scmp.eq.s32.totalorder %s59, 0
      %s62 = sadd.s32 %s61, 1
      %s63 = scalar_select %p60, %s61, %s62
      %p66 = pneg %p60
      %p67 = scmp.eq.s32.totalorder %s13, 1
      %p68 = por %p66, %p67
      %p69 = scmp.ne.s32.totalorder %s61, %s64
      %p70 = scmp.eq.s32.totalorder %s13, 0
      %p71 = por %p69, %p70
      %p72 = scmp.ne.s32.totalorder %s61, %s64
      %p73 = scmp.eq.s32.totalorder %s18, 1
      %p74 = por %p72, %p73
      %p75 = scmp.ne.s32.totalorder %s64, %s65
      %p76 = scmp.eq.s32.totalorder %s18, 0
      %p77 = por %p75, %p76
      %p78 = scmp.ne.s32.totalorder %s64, %s65
      %p79 = scmp.eq.s32.totalorder %s19, 1
      %p80 = por %p78, %p79
      %p82 = scmp.ne.s32.totalorder %s65, %s81
      %p83 = scmp.eq.s32.totalorder %s19, 0
      %p84 = por %p82, %p83
      %s85 = ssub.s32 %s20, %s32
      %s86 = ssub.s32 %s21, %s28
      %s87 = sor.u32 %s85, %s86
      %p88 = scmp.eq.s32.totalorder %s87, 0
      %s90 = sadd.s32 %s89, 1
      %s91 = scalar_select %p88, %s89, %s90
      %p94 = pneg %p88
      %p95 = scmp.eq.s32.totalorder %s13, 1
      %p96 = por %p94, %p95
      %p97 = scmp.ne.s32.totalorder %s89, %s92
      %p98 = scmp.eq.s32.totalorder %s13, 0
      %p99 = por %p97, %p98
      %p100 = scmp.ne.s32.totalorder %s89, %s92
      %p101 = scmp.eq.s32.totalorder %s18, 1
      %p102 = por %p100, %p101
      %p103 = scmp.ne.s32.totalorder %s92, %s93
      %p104 = scmp.eq.s32.totalorder %s18, 0
      %p105 = por %p103, %p104
      %p106 = scmp.ne.s32.totalorder %s92, %s93
      %p107 = scmp.eq.s32.totalorder %s19, 1
      %p108 = por %p106, %p107
      %p110 = scmp.ne.s32.totalorder %s93, %s109
      %p111 = scmp.eq.s32.totalorder %s19, 0
      %p112 = por %p110, %p111
      %s113 = ssub.s32 %s20, %s32
      %p114 = scmp.eq.s32.totalorder %s113, 0
      %s116 = sadd.s32 %s115, 1
      %s117 = scalar_select %p114, %s115, %s116
      %p120 = pneg %p114
      %p121 = scmp.eq.s32.totalorder %s13, 1
      %p122 = por %p120, %p121
      %p123 = scmp.ne.s32.totalorder %s115, %s118
      %p124 = scmp.eq.s32.totalorder %s13, 0
      %p125 = por %p123, %p124
      %p126 = scmp.ne.s32.totalorder %s115, %s118
      %p127 = scmp.eq.s32.totalorder %s18, 1
      %p128 = por %p126, %p127
      %p129 = scmp.ne.s32.totalorder %s118, %s119
      %p130 = scmp.eq.s32.totalorder %s18, 0
      %p131 = por %p129, %p130
      %p132 = scmp.ne.s32.totalorder %s118, %s119
      %p133 = scmp.eq.s32.totalorder %s19, 1
      %p134 = por %p132, %p133
      %p136 = scmp.ne.s32.totalorder %s119, %s135
      %p137 = scmp.eq.s32.totalorder %s19, 0
      %p138 = por %p136, %p137
      %s139 = ssub.s32 %s20, %s32
      %s140 = ssub.s32 %s21, %s28
      %s141 = sor.u32 %s139, %s140
      %p142 = scmp.eq.s32.totalorder %s141, 0
      %s144 = sadd.s32 %s143, 1
      %s145 = scalar_select %p142, %s143, %s144
      %p148 = pneg %p142
      %p149 = scmp.eq.s32.totalorder %s13, 1
      %p150 = por %p148, %p149
      %p151 = scmp.ne.s32.totalorder %s143, %s146
      %p152 = scmp.eq.s32.totalorder %s13, 0
      %p153 = por %p151, %p152
      %p154 = scmp.ne.s32.totalorder %s143, %s146
      %p155 = scmp.eq.s32.totalorder %s18, 1
      %p156 = por %p154, %p155
      %p157 = scmp.ne.s32.totalorder %s146, %s147
      %p158 = scmp.eq.s32.totalorder %s18, 0
      %p159 = por %p157, %p158
      %p160 = scmp.ne.s32.totalorder %s146, %s147
      %p161 = scmp.eq.s32.totalorder %s19, 1
      %p162 = por %p160, %p161
      %p164 = scmp.ne.s32.totalorder %s147, %s163
      %p165 = scmp.eq.s32.totalorder %s19, 0
      %p166 = por %p164, %p165
      %p167 = scmp.le.s32.totalorder 1, %s13
      %p168 = scmp.lt.s32.totalorder %s13, 3
      %p169 = pnand %p167, %p168
      %p170 = pneg %p169
      // Predicated region
      $region9: #{tpu_custom_call.1} parent=5 // pred_check
        _
      $region10: #{tpu_custom_call.1} parent=5 // pred_check_branch
        %172 = sbr.rel (%p169) target = $region12
      $region11: #{tpu_custom_call.1} parent=5 // pred_region
        %s173 = ssub.s32 %s13, 1
      $region12: #{tpu_custom_call.1} parent=5 // pred_fallthru
        _
      %p174 = scmp.lt.s32.totalorder %s13, 2
      // Predicated region
      $region13: #{tpu_custom_call.1} parent=5 // pred_check
        %p175 = pneg %p174
      $region14: #{tpu_custom_call.1} parent=5 // pred_check_branch
        %177 = sbr.rel (%p175) target = $region16
      $region15: #{tpu_custom_call.1} parent=5 // pred_region
        // Predicated region
        $region17: #{tpu_custom_call.1} parent=15 // pred_check
          %p178 = pneg %p45
        $region18: #{tpu_custom_call.1} parent=15 // pred_check_branch
          %180 = sbr.rel (%p178) target = $region20
        $region19: #{tpu_custom_call.1} parent=15 // pred_region
          %p181 = scmp.lt.s32.totalorder %s20, 1
          %s182 = scalar_select %p181, %s20, 1
          %s183 = smul.addr %s182, 4
          %s184 = scalar_lea.vmem %s0, %s183
        $region20: #{tpu_custom_call.1} parent=15 // pred_fallthru
          _
        // Predicated region
        $region21: #{tpu_custom_call.1} parent=15 // pred_check
          %p185 = pneg %p71
        $region22: #{tpu_custom_call.1} parent=15 // pred_check_branch
          %187 = sbr.rel (%p185) target = $region24
        $region23: #{tpu_custom_call.1} parent=15 // pred_region
          %p188 = scmp.lt.s32.totalorder %s20, 1
          %s189 = scalar_select %p188, %s20, 1
          %s190 = smul.addr %s189, 16
          %s191 = smul.addr %s190, 4
          %s192 = scalar_lea.vmem %s1, %s191
        $region24: #{tpu_custom_call.1} parent=15 // pred_fallthru
          _
        // Predicated region
        $region25: #{tpu_custom_call.1} parent=15 // pred_check
          %p193 = pneg %p99
        $region26: #{tpu_custom_call.1} parent=15 // pred_check_branch
          %195 = sbr.rel (%p193) target = $region28
        $region27: #{tpu_custom_call.1} parent=15 // pred_region
          %p196 = scmp.lt.s32.totalorder %s20, 1
          %s197 = scalar_select %p196, %s20, 1
          %p198 = scmp.lt.s32.totalorder %s21, 0
          %s199 = scalar_select %p198, %s21, 0
          %s200 = sadd.s32 %s199, %s197
          %s201 = smul.addr %s200, 8
          %s202 = scalar_lea.vmem %s2, %s201
        $region28: #{tpu_custom_call.1} parent=15 // pred_fallthru
          _
        // Predicated region
        $region29: #{tpu_custom_call.1} parent=15 // pred_check
          %p203 = pneg %p125
        $region30: #{tpu_custom_call.1} parent=15 // pred_check_branch
          %205 = sbr.rel (%p203) target = $region32
        $region31: #{tpu_custom_call.1} parent=15 // pred_region
          %p206 = scmp.lt.s32.totalorder %s20, 1
          %s207 = scalar_select %p206, %s20, 1
          %s208 = scalar_lea.vmem %s3, %s207
        $region32: #{tpu_custom_call.1} parent=15 // pred_fallthru
          _
      $region16: #{tpu_custom_call.1} parent=5 // pred_fallthru
        _
      %p209 = scmp.le.s32.totalorder 1, %s13
      %p210 = scmp.lt.s32.totalorder %s13, 3
      %p211 = pnand %p209, %p210
      %p212 = pneg %p211
      // Predicated region
      $region33: #{tpu_custom_call.1} parent=5 // pred_check
        _
      $region34: #{tpu_custom_call.1} parent=5 // pred_check_branch
        %214 = sbr.rel (%p211) target = $region36
      $region35: #{tpu_custom_call.1} parent=5 // pred_region
        %s215 = ssub.s32 %s13, 1
        %p216 = scmp.lt.s32.totalorder %s22, 1
        %s217 = scalar_select %p216, %s22, 1
        %s218 = smul.addr %s217, 4
        %s219 = scalar_lea.vmem %s0, %s218
        %p220 = pneg %p51
        %p221 = pneg %p48
        %p222 = scmp.lt.s32.totalorder %s22, 1
        %s223 = scalar_select %p222, %s22, 1
        %s224 = smul.addr %s223, 16
        %s225 = smul.addr %s224, 4
        %s226 = scalar_lea.vmem %s1, %s225
        %p227 = pneg %p77
        %p228 = pneg %p74
        %p229 = scmp.lt.s32.totalorder %s22, 1
        %s230 = scalar_select %p229, %s22, 1
        %p231 = scmp.lt.s32.totalorder %s23, 0
        %s232 = scalar_select %p231, %s23, 0
        %s233 = sadd.s32 %s232, %s230
        %s234 = smul.addr %s233, 8
        %s235 = scalar_lea.vmem %s2, %s234
        %p236 = pneg %p105
        %p237 = pneg %p102
        %p238 = scmp.lt.s32.totalorder %s22, 1
        %s239 = scalar_select %p238, %s22, 1
        %s240 = scalar_lea.vmem %s3, %s239
        %p241 = pneg %p131
        %p242 = pneg %p128
        %p243 = pneg %p159
        %p244 = pneg %p156
        %s245 = sand.u32 %s146, 1
        %s246 = scalar_lea.sflag [#allocation3], %s245
        %s247 = sand.u32 %s146, 1
        %s248 = smul.addr %s247, 8
        %s249 = scalar_lea.vmem [#allocation2], %s248
        %p250 = scmp.lt.s32.totalorder %s22, 1
        %s251 = scalar_select %p250, %s22, 1
        %s252 = smul.addr %s251, 4
        %s253 = scalar_lea.vmem %s0, %s252
        %p254 = scmp.lt.s32.totalorder %s22, 1
        %s255 = scalar_select %p254, %s22, 1
        %s256 = smul.addr %s255, 16
        %s257 = smul.addr %s256, 4
        %s258 = scalar_lea.vmem %s1, %s257
        %p259 = scmp.lt.s32.totalorder %s22, 1
        %s260 = scalar_select %p259, %s22, 1
        %p261 = scmp.lt.s32.totalorder %s23, 0
        %s262 = scalar_select %p261, %s23, 0
        %s263 = sadd.s32 %s262, %s260
        %s264 = smul.addr %s263, 8
        %s265 = scalar_lea.vmem %s2, %s264
        %p266 = scmp.lt.s32.totalorder %s22, 1
        %s267 = scalar_select %p266, %s22, 1
        %s268 = scalar_lea.vmem %s3, %s267
        %s271 = smul.u32 %s23, 8
        %s272 = sshra.s32 %s271, 3
        %s273 = sand.u32 %s271, 7
        %s274 = smul.addr %s272, 4
        %s275 = scalar_lea.vmem %s253, %s274
        %v276 = vld [vmem:[%s275] sm:$0xf]
        %v277 = vmul.bf16 %v276, 1054293719
        %v278 = vld [vmem:[%s258] sm:$0xf]
        %v279 = vld [vmem:[%s258 + $0x4] sm:$0xf]
        %v280 = vld [vmem:[%s258 + $0x8] sm:$0xf]
        %v281 = vld [vmem:[%s258 + $0xc] sm:$0xf]
        %v282 = vld [vmem:[%s258 + $0x10] sm:$0xf]
        %v283 = vld [vmem:[%s258 + $0x14] sm:$0xf]
        %v284 = vld [vmem:[%s258 + $0x18] sm:$0xf]
        %v285 = vld [vmem:[%s258 + $0x1c] sm:$0xf]
        %v286 = vld [vmem:[%s258 + $0x20] sm:$0xf]
        %v287 = vld [vmem:[%s258 + $0x24] sm:$0xf]
        %v288 = vld [vmem:[%s258 + $0x28] sm:$0xf]
        %v289 = vld [vmem:[%s258 + $0x2c] sm:$0xf]
        %v290 = vld [vmem:[%s258 + $0x30] sm:$0xf]
        %v291 = vld [vmem:[%s258 + $0x34] sm:$0xf]
        %v292 = vld [vmem:[%s258 + $0x38] sm:$0xf]
        %v293 = vld [vmem:[%s258 + $0x3c] sm:$0xf]
        %v310 = vunpack.c.l.b16 %v278
        %v311 = vunpack.c.l.b16 %v279
        %v312 = vunpack.c.l.b16 %v280
        %v313 = vunpack.c.l.b16 %v281
        %v314 = vunpack.c.l.b16 %v282
        %v315 = vunpack.c.l.b16 %v283
        %v316 = vunpack.c.l.b16 %v284
        %v317 = vunpack.c.l.b16 %v285
        %v318 = vunpack.c.l.b16 %v286
        %v319 = vunpack.c.l.b16 %v287
        %v320 = vunpack.c.l.b16 %v288
        %v321 = vunpack.c.l.b16 %v289
        %v322 = vunpack.c.l.b16 %v290
        %v323 = vunpack.c.l.b16 %v291
        %v324 = vunpack.c.l.b16 %v292
        %v325 = vunpack.c.l.b16 %v293
        %v326 = vpack.c.b16 %v311, %v310
        %v327 = vpack.c.b16 %v313, %v312
        %v328 = vpack.c.b16 %v315, %v314
        %v329 = vpack.c.b16 %v317, %v316
        %v330 = vpack.c.b16 %v319, %v318
        %v331 = vpack.c.b16 %v321, %v320
        %v332 = vpack.c.b16 %v323, %v322
        %v333 = vpack.c.b16 %v325, %v324
        %342 = vmatprep.subr.bf16.mxu0 0
        %343 = vmatpush1.bf16.msra.mxu0 %v333
        %344 = vmatprep.subr.bf16.mxu0 0
        %345 = vmatpush1.bf16.msra.mxu0 %v332
        %346 = vmatprep.subr.bf16.mxu0 0
        %347 = vmatpush1.bf16.msra.mxu0 %v331
        %348 = vmatprep.subr.bf16.mxu0 0
        %349 = vmatpush1.bf16.msra.mxu0 %v330
        %350 = vmatprep.subr.bf16.mxu0 0
        %351 = vmatpush1.bf16.msra.mxu0 %v329
        %352 = vmatprep.subr.bf16.mxu0 0
        %353 = vmatpush1.bf16.msra.mxu0 %v328
        %354 = vmatprep.subr.bf16.mxu0 0
        %355 = vmatpush1.bf16.msra.mxu0 %v327
        %356 = vmatprep.subr.bf16.mxu0 0
        %357 = vmatpush1.bf16.msra.mxu0 %v326
        %358 = vmatprep.subr.bf16.mxu0 0
        %359 = vmatpush2.bf16.msra.mxu0 0
        %360 = vmatprep.subr.bf16.mxu0 0
        %361 = vmatpush2.bf16.msra.mxu0 0
        %362 = vmatprep.subr.bf16.mxu0 0
        %363 = vmatpush2.bf16.msra.mxu0 0
        %364 = vmatprep.subr.bf16.mxu0 0
        %365 = vmatpush2.bf16.msra.mxu0 0
        %366 = vmatprep.subr.bf16.mxu0 0
        %367 = vmatpush2.bf16.msra.mxu0 0
        %368 = vmatprep.subr.bf16.mxu0 0
        %369 = vmatpush2.bf16.msra.mxu0 0
        %370 = vmatprep.subr.bf16.mxu0 0
        %371 = vmatpush2.bf16.msra.mxu0 0
        %372 = vmatprep.subr.bf16.mxu0 0
        %373 = vmatpush2.bf16.msra.mxu0 0
        %374 = vmatprep.mubr.bf16.mxu0 0
        %375 = vmatmul.mubr.bf16.gmra.mxu0 %v277
        %v376 = vpop.f32.mrf.mxu0
        %v377 = vadd.f32 0.0, %v376
        %v378 = vpop.f32.mrf.mxu0
        %v379 = vpop.f32.mrf.mxu0
        %v380 = vpop.f32.mrf.mxu0
        %381 = vdwg.mxu0
        %v382 = vld [vmem:[%s265] sm:$0xff]
        %vm383 = vcmp.ne.f32.partialorder %v382, 0.0
        %v384 = vld [vmem:[%s268] sm:$0x1]
        %vm385 = vcmp.ne.f32.partialorder %v384, 0.0
        %v386 = vsel %vm383, 1, 0
        %387 = vset.pattern.permute.xlu0 0
        %388 = vperm.xlu0 %387, %v386
        %v389 = vpop.permute.xlu0 %388
        %vm390 = vcmp.eq.s32.totalorder %v389, 1
        %v391 = vsel %vm385, 1, 0
        %v392 = vlaneseq
        %v393 = vshrl.u32 %v392, 7
        %v394 = vsub.s32 0, %v393
        %v395 = vrot.slane %v391, %v394
        %vm396 = vcmp.eq.s32.totalorder %v395, 1
        %vm397 = vmand %vm390, %vm396
        %v398 = vsel %vm397, %v377, -10000000.0
        %vm399 = vcmask 64512
        %v400 = vsel %vm399, %v398, -inf
        %401 = vmax.xlane.f32.xlu0 %v400
        %v402 = vpop.xlane.xlu0 %401
        %v403 = vsub.f32 %v398, %v402
        %v404 = vmul.f32 %v403, 1.442695
        %v405 = vpow.pop %v404
        %v406 = vsel %vm399, %v405, 0.0
        %407 = vadd.xlane.f32.xlu0 %v406
        %v408 = vpop.xlane.xlu0 %407
        %v409 = vld [vmem:[%s253] sm:$0xf]
        %v410 = vpack.c.bf16 %v405, %v405
        %v412 = vsel %vm399, %v410, 0
        %vm414 = vcmask 1043456
        %v416 = vsel %vm414, %v409, 0
        %418 = vmatprep.subr.bf16.mxu0 0
        %419 = vmatpush1.bf16.msra.mxu0 0
        %420 = vmatprep.subr.bf16.mxu0 0
        %421 = vmatpush1.bf16.msra.mxu0 0
        %422 = vmatprep.subr.bf16.mxu0 0
        %423 = vmatpush1.bf16.msra.mxu0 0
        %424 = vmatprep.subr.bf16.mxu0 0
        %425 = vmatpush1.bf16.msra.mxu0 0
        %426 = vmatprep.subr.bf16.mxu0 0
        %427 = vmatpush1.bf16.msra.mxu0 0
        %428 = vmatprep.subr.bf16.mxu0 0
        %429 = vmatpush1.bf16.msra.mxu0 0
        %430 = vmatprep.subr.bf16.mxu0 0
        %431 = vmatpush1.bf16.msra.mxu0 0
        %432 = vmatprep.subr.bf16.mxu0 0
        %433 = vmatpush1.bf16.msra.mxu0 %v416
        %434 = vmatprep.subr.bf16.mxu0 0
        %435 = vmatpush2.bf16.msra.mxu0 0
        %436 = vmatprep.subr.bf16.mxu0 0
        %437 = vmatpush2.bf16.msra.mxu0 0
        %438 = vmatprep.subr.bf16.mxu0 0
        %439 = vmatpush2.bf16.msra.mxu0 0
        %440 = vmatprep.subr.bf16.mxu0 0
        %441 = vmatpush2.bf16.msra.mxu0 0
        %442 = vmatprep.subr.bf16.mxu0 0
        %443 = vmatpush2.bf16.msra.mxu0 0
        %444 = vmatprep.subr.bf16.mxu0 0
        %445 = vmatpush2.bf16.msra.mxu0 0
        %446 = vmatprep.subr.bf16.mxu0 0
        %447 = vmatpush2.bf16.msra.mxu0 0
        %448 = vmatprep.subr.bf16.mxu0 0
        %449 = vmatpush2.bf16.msra.mxu0 0
        %450 = vmatprep.mubr.bf16.mxu0 0
        %451 = vmatmul.mubr.bf16.gmra.mxu0 %v412
        %v452 = vpop.f32.mrf.mxu0
        %v453 = vadd.f32 0.0, %v452
        %v454 = vpop.f32.mrf.mxu0
        %v455 = vpop.f32.mrf.mxu0
        %v456 = vpop.f32.mrf.mxu0
        %457 = vdwg.mxu0
        %v458 = vrcp.pop %v408
        %v459 = vmul.f32 %v453, %v458
        %460 = vst [vmem:[%s249] sm:$0xff] %v459
        %s461 = sand.u32 %s146, 1
        %s462 = scalar_lea.sflag [#allocation3], %s461
        %s463 = sand.u32 %s146, 1
        %s464 = smul.addr %s463, 8
        %s465 = scalar_lea.vmem [#allocation2], %s464
        // Predicated region
        $region37: #{tpu_custom_call.1} parent=35 // pred_check
          %p466 = pneg %p156
        $region38: #{tpu_custom_call.1} parent=35 // pred_check_branch
          %468 = sbr.rel (%p466) target = $region40
        $region39: #{tpu_custom_call.1} parent=35 // pred_region
          %s470 = ssub.s32 128, 128
          %471 = vsyncadd %s462, %s470
          %s472 = sadd.s32 %s23, %s22
          %s473 = smul.addr %s472, 128
          %s474 = scalar_lea.hbm %s4, %s473
          %s476 = sshll.u32 %s465, 4
          %s477 = int_to_ptr.vmem [resolvable:$true] %s476
          %479 = dma.vmem_to_hbm [thread:$0]  %s477, 128, %s474, %s462
        $region40: #{tpu_custom_call.1} parent=35 // pred_fallthru
          _
      $region36: #{tpu_custom_call.1} parent=5 // pred_fallthru
        _
      %p480 = scmp.le.s32.totalorder 2, %s13
      // Predicated region
      $region41: #{tpu_custom_call.1} parent=5 // pred_check
        %p481 = pneg %p480
      $region42: #{tpu_custom_call.1} parent=5 // pred_check_branch
        %483 = sbr.rel (%p481) target = $region44
      $region43: #{tpu_custom_call.1} parent=5 // pred_region
        %s484 = ssub.s32 %s13, 2
        // Predicated region
        $region45: #{tpu_custom_call.1} parent=43 // pred_check
          %p485 = pneg %p162
        $region46: #{tpu_custom_call.1} parent=43 // pred_check_branch
          %487 = sbr.rel (%p485) target = $region48
        $region47: #{tpu_custom_call.1} parent=43 // pred_region
          %s488 = sand.u32 %s147, 1
          %s489 = scalar_lea.sflag [#allocation3], %s488
          %s490 = sand.u32 %s147, 1
          %s491 = smul.addr %s490, 8
          %s492 = scalar_lea.vmem [#allocation2], %s491
          %493 = dma.done %s489, 128
        $region48: #{tpu_custom_call.1} parent=43 // pred_fallthru
          _
      $region44: #{tpu_custom_call.1} parent=5 // pred_fallthru
        _
    $region6: #{tpu_custom_call.1} parent=1 // loop_footer
      %s17 = sadd.s32 1, %s13
    $region7: #{tpu_custom_call.1} parent=1 // loop_footer_branch
      %12 = sbr.rel target = $region3
    $region8: #{tpu_custom_call.1} parent=1 // loop_exit
      _
    %494 = vsyncpa [#allocation3], 1
    %s495 = scalar_lea.sflag [#allocation3], 1
    %496 = vsyncpa %s495, 1

</llo_original>
